<compile_context>
chip_gen: v7x
topology: tpu7x:2x2x1
jax: 0.10.0
libtpu: 0.0.40
codegen_flags: <defaults>
</compile_context>

<pallas_src>
import jax
import jax.numpy as jnp
from jax.experimental import pallas as pl
from jax.experimental.pallas import tpu as pltpu


def _copy_kernel(x_ref, o_ref):
    # Identity copy: all layout work (the torch .view) happens wrapper-side for
    # free; the kernel body is a straight lane-dense pass-through.
    o_ref[...] = x_ref[...]


def _vmem_capacity_bytes():
    try:
        return int(pltpu.get_tpu_info().vmem_capacity_bytes)
    except Exception:
        return 64 * 1024 * 1024  # conservative: v7x per-TensorCore VMEM


def _sublane_multiple(itemsize):
    # Sub-32-bit dtypes pack along sublanes: f32 -> 8, bf16 -> 16, int8/fp8 -> 32.
    if itemsize >= 4:
        return 8
    return 8 * (4 // itemsize)


_COL_CANDIDATES = (8192, 4096, 2048, 1024, 512, 256, 128)


def _choose_2d_layout(total, sub_mult):
    """Factor `total` elements into (rows, cols) with cols a large multiple of
    128 (unmasked, lane-dense vst's).  Prefer the widest cols that still leaves
    >= 4 sublane-aligned row blocks so pipelining / megacore sharding survive."""
    for cols in _COL_CANDIDATES:
        if total % cols == 0 and (total // cols) >= 4 * sub_mult:
            return total // cols, cols
    for cols in _COL_CANDIDATES:  # short-rows case: still lane-dense
        if total % cols == 0:
            return total // cols, cols
    return None  # no lane-dense factorization: caller uses the free reshape


def _choose_block_rows(rows, cols, itemsize, sub_mult, max_block_bytes):
    """Largest row-block that divides rows, is a multiple of the dtype's
    sublane pack factor, fits the per-block byte budget, and (in preference
    order) yields >= 4 even grid steps (v7x: 2 TCs + in/out DMA overlap),
    >= 2 even steps, >= 2 steps, or any."""
    cap = max(1, max_block_bytes // (cols * itemsize))
    divisors = [d for d in range(1, rows + 1) if rows % d == 0]
    valid = [d for d in divisors if d % sub_mult == 0 and d <= cap]
    for ok in (lambda s: s >= 4 and s % 2 == 0,
               lambda s: s >= 2 and s % 2 == 0,
               lambda s: s >= 2,
               lambda s: True):
        tier = [d for d in valid if ok(rows // d)]
        if tier:
            return max(tier)
    # No sublane-aligned divisor: single full-extent block only if it is small,
    # otherwise signal "use the free reshape instead" (never a giant block).
    if rows * cols * itemsize <= max_block_bytes:
        return rows
    return None


def pixel_shuffle(x, upscale_factor=2, *, force_kernel=False):
    """Replicates PixelShuffle.forward: input.view(n, c // 2, 2 * w).

    Note: the PyTorch module hardcodes the factor 2 in forward and ignores
    `upscale_factor`; we mirror that (this is NOT nn.PixelShuffle's
    channel-to-space interleaving, it is the module's literal .view()).
    """
    n, c, w = x.shape
    if c % 2 != 0:
        # Mirrors torch .view() failing when element counts do not match.
        raise ValueError(f"PixelShuffle.forward requires an even channel count, got c={c}")
    out_shape = (n, c // 2, 2 * w)

    if not force_kernel:
        # Fast path: contiguous view == metadata-only reshape. No HBM traffic.
        return jnp.reshape(x, out_shape)

    itemsize = jnp.dtype(x.dtype).itemsize
    sub_mult = _sublane_multiple(itemsize)
    total = n * c * w

    layout = _choose_2d_layout(total, sub_mult)
    if layout is None:
        # Awkward size: degrade gracefully to the free reshape instead of a
        # masked/ragged (and possibly VMEM-overflowing) copy.
        return jnp.reshape(x, out_shape)
    rows, cols = layout

    # Generation-aware block budget: 8 MiB blocks on 128 MiB-VMEM chips
    # (v5e/v6e) to amortize the ~0.35 us per-step overhead; 4 MiB on v7x
    # (64 MiB VMEM) so 2x-in + 2x-out buffering stays well under budget.
    vmem_cap = _vmem_capacity_bytes()
    max_block_bytes = (8 * 1024 * 1024 if vmem_cap >= 100 * 1024 * 1024
                       else 4 * 1024 * 1024)

    br = _choose_block_rows(rows, cols, itemsize, sub_mult, max_block_bytes)
    if br is None:
        return jnp.reshape(x, out_shape)

    x2d = jnp.reshape(x, (rows, cols))  # free, contiguous
    block_bytes = br * cols * itemsize
    # Derived scoped-VMEM limit: 2 input + 2 output buffers, +25% slack,
    # with a small floor for compiler scratch; never above physical VMEM.
    vmem_limit = min(vmem_cap, max(4 * 1024 * 1024, int(4 * block_bytes * 1.25)))

    # NOTE: pipeline_mode=pl.Buffered(3) is a possible low-single-digit% win for
    # very short grids; skipped to keep the VMEM footprint minimal on v7x.
    out2d = pl.pallas_call(
        _copy_kernel,
        out_shape=jax.ShapeDtypeStruct((rows, cols), x.dtype),
        grid=(rows // br,),
        in_specs=[pl.BlockSpec((br, cols), lambda i: (i, 0))],
        out_specs=pl.BlockSpec((br, cols), lambda i: (i, 0)),
        input_output_aliases={0: 0},  # let XLA donate/alias the HBM buffer
        compiler_params=pltpu.CompilerParams(
            dimension_semantics=("parallel",),
            vmem_limit_bytes=vmem_limit,
        ),
    )(x2d)

    # Free, contiguous reshape to the module's output shape.
    return jnp.reshape(out2d, out_shape)


if __name__ == "__main__":
    key = jax.random.PRNGKey(0)
    k1, k2 = jax.random.split(key)

    # Small shape consistent with the module's forward: (N, C, W) = (2, 4, 16).
    x = jax.random.normal(k1, (2, 4, 16), dtype=jnp.float32)
    ref = jnp.reshape(x, (2, 2, 32))

    # 1) Default fast path: pure metadata reshape.
    out_fast = jax.block_until_ready(pixel_shuffle(x, upscale_factor=2))
    assert out_fast.shape == ref.shape and out_fast.dtype == ref.dtype
    assert jnp.array_equal(out_fast, ref), "fast-path mismatch vs reference reshape"

    # 2) Forced Pallas path on the small shape (single full-extent block).
    out_k = jax.block_until_ready(pixel_shuffle(x, upscale_factor=2, force_kernel=True))
    assert jnp.array_equal(out_k, ref), "kernel mismatch vs reference reshape (small case)"

    # 3) Larger case exercising the tiled, even multi-step grid path.
    x2 = jax.random.normal(k2, (8, 64, 512), dtype=jnp.float32)
    ref2 = jnp.reshape(x2, (8, 32, 1024))
    out2 = jax.block_until_ready(pixel_shuffle(x2, upscale_factor=2, force_kernel=True))
    assert jnp.array_equal(out2, ref2), "kernel mismatch vs reference reshape (tiled case)"

    print("KERNEL_OK")
</pallas_src>

<mosaic_0001>
module attributes {stable_mosaic.version = 11 : i64} {
  func.func @_copy_kernel(%arg0: i32, %arg1: memref<1x128xf32, #tpu.memory_space<vmem>>, %arg2: memref<1x128xf32, #tpu.memory_space<vmem>>) attributes {dimension_semantics = [#tpu.dimension_semantics<parallel>], iteration_bounds = array<i64: 1>, scalar_prefetch = 0 : i64, scratch_operands = 0 : i64, tpu.core_type = #tpu.core_type<tc>, window_params = [{transform_indices = @transform_0, window_bounds = array<i64: 1, 128>}, {transform_indices = @transform_1, window_bounds = array<i64: 1, 128>}]} {
    %c0 = arith.constant 0 : index
    %c0_0 = arith.constant 0 : index
    %0 = vector.load %arg1[%c0, %c0_0] : memref<1x128xf32, #tpu.memory_space<vmem>>, vector<1x128xf32>
    %c0_1 = arith.constant 0 : index
    %c0_2 = arith.constant 0 : index
    %1 = vector.load %arg2[%c0_1, %c0_2] : memref<1x128xf32, #tpu.memory_space<vmem>>, vector<1x128xf32>
    tpu.vector_store %arg2[%c0_1, %c0_2], %0 {strides = array<i32>} : memref<1x128xf32, #tpu.memory_space<vmem>>, vector<1x128xf32>,
    return
  }
  func.func @transform_0(%arg0: i32) -> (i32, i32) {
    %c0_i32 = arith.constant 0 : i32
    %c0_i32_0 = arith.constant 0 : i32
    return %arg0, %c0_i32 : i32, i32
  }
  func.func @transform_1(%arg0: i32) -> (i32, i32) {
    %c0_i32 = arith.constant 0 : i32
    %c0_i32_0 = arith.constant 0 : i32
    return %arg0, %c0_i32 : i32, i32
  }
}

</mosaic_0001>

<llo_original>
// kernel: tpu_custom_call.1
$region0: #{tpu_custom_call.1}
  #allocation0 [shape = 'u32[]', space=smem, size = 0x4, offset = 0x4, fixed_abs, tag = 'smem constant byte address 0x4 - core index']
  #allocation1 [shape = 'u32[144,128]{1,0:T(1,128)}', space=vmem, size = 0x12000, scoped, tag = 'internal scratch']
  %s0 = inlined_call_operand.hbm [shape: f32[1,128], index: 0, kind: input, shape index: {}, may-alias: {0,1}]
  %s1 = inlined_call_operand.hbm [shape: f32[1,128], index: 1, kind: output, shape index: {}, may-alias: {0,1}]
  %s2 = sld [smem:[#allocation0]]
  $region18: #{tpu_custom_call.1} parent=0
    _
  %s4 = ssub.s32 1, %s2
  %s5 = scalar_select 0, %s4, %s2
  $region1: #{tpu_custom_call.1} parent=0
    #allocation2 [shape = 'u8[512]{0}', space=vmem, size = 0x400, scoped, tag = 'input window, operand 0, single buffered']
    #allocation3 [shape = 's32[1]{0}', space=sflag, size = 0x4, scoped, tag = 'scoped memory for tpu_custom_call.1']
    #allocation4 [shape = 's32[1]{0}', space=sflag, size = 0x4, scoped, tag = 'scoped memory for tpu_custom_call.1']
    #allocation5 [shape = 'u8[512]{0}', space=vmem, size = 0x400, scoped, tag = 'output window, operand 0, single buffered']
    %6 = vsyncpa [#allocation3], 0
    %7 = vsyncpa [#allocation4], 0
    // Predicated region
    $region2: #{tpu_custom_call.1} parent=1 // pred_check
      _
    $region3: #{tpu_custom_call.1} parent=1 // pred_check_branch
      %9 = sbr.rel (0) target = $region5
    $region4: #{tpu_custom_call.1} parent=1 // pred_region
      %s11 = ssub.s32 16, 16
      %12 = vsyncadd [#allocation3], %s11
      %s14 = sshll.u32 [#allocation2], 4
      %s15 = int_to_ptr.vmem [resolvable:$true] %s14
      %17 = dma.hbm_to_vmem [thread:$0]  %s0, 16, %s15, [#allocation3]
    $region5: #{tpu_custom_call.1} parent=1 // pred_fallthru
      _
    // Predicated region
    $region6: #{tpu_custom_call.1} parent=1 // pred_check
      _
    $region7: #{tpu_custom_call.1} parent=1 // pred_check_branch
      %19 = sbr.rel (0) target = $region9
    $region8: #{tpu_custom_call.1} parent=1 // pred_region
      %20 = dma.done [#allocation3], 16
    $region9: #{tpu_custom_call.1} parent=1 // pred_fallthru
      _
    %v21 = vld [vmem:[#allocation2] sm:$0x1]
    %22 = vst [vmem:[#allocation5] sm:$0x1] %v21
    // Predicated region
    $region10: #{tpu_custom_call.1} parent=1 // pred_check
      _
    $region11: #{tpu_custom_call.1} parent=1 // pred_check_branch
      %24 = sbr.rel (0) target = $region13
    $region12: #{tpu_custom_call.1} parent=1 // pred_region
      %s26 = ssub.s32 16, 16
      %27 = vsyncadd [#allocation4], %s26
      %s29 = sshll.u32 [#allocation5], 4
      %s30 = int_to_ptr.vmem [resolvable:$true] %s29
      %32 = dma.vmem_to_hbm [thread:$0]  %s30, 16, %s1, [#allocation4]
    $region13: #{tpu_custom_call.1} parent=1 // pred_fallthru
      _
    // Predicated region
    $region14: #{tpu_custom_call.1} parent=1 // pred_check
      _
    $region15: #{tpu_custom_call.1} parent=1 // pred_check_branch
      %34 = sbr.rel (0) target = $region17
    $region16: #{tpu_custom_call.1} parent=1 // pred_region
      %35 = dma.done [#allocation4], 16
    $region17: #{tpu_custom_call.1} parent=1 // pred_fallthru
      _
    %36 = vsyncpa [#allocation3], 1
    %37 = vsyncpa [#allocation4], 1

</llo_original>
